<compile_context>
chip_gen: v6e
topology: v6e:2x2x1
jax: 0.10.0
libtpu: 0.0.40
codegen_flags: <defaults>
</compile_context>

<pallas_src>
import jax
import jax.numpy as jnp
from jax.experimental import pallas as pl
from jax.experimental.pallas import tpu as pltpu


def _norm_clamp_kernel(x_ref, scale_ref, bias_ref, o_ref):
    """One (row_tile, lane_tile) block: y = clip(x*scale_row + bias_row, -1, 1)."""
    x = x_ref[...].astype(jnp.float32)
    y = jnp.clip(x * scale_ref[...] + bias_ref[...], -1.0, 1.0)
    o_ref[...] = y.astype(o_ref.dtype)


def _round_up(n: int, m: int) -> int:
    return ((n + m - 1) // m) * m


def _device_budget():
    """Return (f32 working-block budget in bytes, vmem_limit_bytes or None)."""
    kind = ""
    try:
        kind = jax.devices()[0].device_kind.lower()
    except Exception:
        pass
    if "v5 lite" in kind or "v5e" in kind or "v5lite" in kind:
        # v5e: 16 MiB default scoped VMEM; 2x(in+out) at 3 MiB stays under it
        # and ~820 GB/s HBM already amortizes the ~0.35 us/step overhead.
        return 3 << 20, None
    if "v7" in kind:
        # v7x: only 64 MiB physical VMEM; 6 MiB blocks double-buffered = 24 MiB.
        return 6 << 20, 48 << 20
    # v6e / v5p / unknown: plenty of VMEM, fast HBM -> big blocks.
    return 8 << 20, 48 << 20


def _choose_tiles(R, S, sub_mult, max_block_elems):
    """Pick (row_tile, lane_tile) for the (R, S) slab.

    Prefer a full-row-width lane tile (single contiguous HBM run per block,
    unmasked full-width stores); split the lane axis only when one sublane
    group of full-width rows already exceeds the block budget.
    """
    if sub_mult * S <= max_block_elems:
        lane_tile = S                      # == full array dim -> always legal
    else:
        lane_tile = max(
            128,
            min(_round_up(S, 128), (max_block_elems // sub_mult) // 128 * 128),
        )
    rows_cap = max(sub_mult, (max_block_elems // lane_tile) // sub_mult * sub_mult)
    row_tile = min(_round_up(R, sub_mult), rows_cap)
    return row_tile, lane_tile


def img_augmentor_forward(x, mean, std, *, out_dtype=jnp.float32, alias_input=False):
    """Pallas implementation of ImgAugmentor.forward (default config path).

    x    : float NCHW array, values in [0, 1]
           (i.e. output of transforms['from_np.uint8_to_torch.float'])
    mean : (C,) per-channel mean of the 'preproc' Normalize
    std  : (C,) per-channel std  of the 'preproc' Normalize
    returns `out_dtype` NCHW, clamped to [-1, 1]
    """
    B, C, H, W = x.shape
    R, S = B * C, H * W
    in_dtype = jnp.dtype(x.dtype)

    # Fold the normalization into per-row scale/bias (tiny arrays, plain JAX).
    scale = (1.0 / std).astype(jnp.float32)                  # (C,)
    bias = (-mean / std).astype(jnp.float32)                 # (C,)
    scale_rows = jnp.tile(scale, B).reshape(R, 1)            # (B*C, 1)
    bias_rows = jnp.tile(bias, B).reshape(R, 1)              # (B*C, 1)

    # Lane-dense 2D view in the native dtype (free contiguous collapse).
    x2 = x.reshape(R, S)

    # Sublane multiple follows the input dtype's tiling (8 f32, 16 bf16, 32 i8).
    sub_mult = {1: 32, 2: 16, 4: 8}.get(in_dtype.itemsize, 8)
    budget_bytes, vmem_limit = _device_budget()
    row_tile, lane_tile = _choose_tiles(R, S, sub_mult, budget_bytes // 4)
    grid = (pl.cdiv(R, row_tile), pl.cdiv(S, lane_tile))     # rows outer, lanes inner

    out_dtype = jnp.dtype(out_dtype)
    cost = pl.CostEstimate(
        flops=2 * R * S,
        transcendentals=0,
        bytes_accessed=R * S * (in_dtype.itemsize + out_dtype.itemsize) + 2 * R * 4,
    )

    kwargs = {}
    if alias_input and in_dtype == out_dtype:
        # Reuse x's HBM buffer for the output (most useful when the caller
        # donates x at a jit boundary).
        kwargs["input_output_aliases"] = {0: 0}

    out = pl.pallas_call(
        _norm_clamp_kernel,
        out_shape=jax.ShapeDtypeStruct((R, S), out_dtype),
        grid_spec=pl.GridSpec(
            grid=grid,
            in_specs=[
                pl.BlockSpec((row_tile, lane_tile), lambda i, j: (i, j)),
                pl.BlockSpec((row_tile, 1), lambda i, j: (i, 0)),
                pl.BlockSpec((row_tile, 1), lambda i, j: (i, 0)),
            ],
            out_specs=pl.BlockSpec((row_tile, lane_tile), lambda i, j: (i, j)),
        ),
        compiler_params=pltpu.CompilerParams(
            dimension_semantics=("parallel", "parallel"),
            vmem_limit_bytes=vmem_limit,
        ),
        cost_estimate=cost,
        **kwargs,
    )(x2, scale_rows, bias_rows)

    return out.reshape(B, C, H, W)


def _reference(x, mean, std):
    """Pure-JAX reference for the same forward semantics."""
    y = (x.astype(jnp.float32) - mean[None, :, None, None]) / std[None, :, None, None]
    return jnp.clip(y, -1.0, 1.0)


if __name__ == "__main__":
    key = jax.random.PRNGKey(0)

    # Small image batch: 2 images, 3 channels, 16x16, values in [0, 1] (NCHW).
    B, C, H, W = 2, 3, 16, 16
    x = jax.random.uniform(key, (B, C, H, W), dtype=jnp.float32)

    # Deterministic 'preproc' Normalize parameters (maps [0,1] -> [-1,1]).
    mean = jnp.full((C,), 0.5, dtype=jnp.float32)
    std = jnp.full((C,), 0.5, dtype=jnp.float32)

    ref = _reference(x, mean, std)          # computed before the kernel call

    out = img_augmentor_forward(x, mean, std)
    out = jax.block_until_ready(out)

    assert out.shape == (B, C, H, W)
    assert out.dtype == jnp.float32
    assert jnp.allclose(out, ref, atol=1e-6, rtol=1e-6)
    assert float(jnp.max(out)) <= 1.0 and float(jnp.min(out)) >= -1.0

    print("KERNEL_OK")
</pallas_src>

<mosaic_0001>
module attributes {stable_mosaic.version = 11 : i64} {
  func.func @_norm_clamp_kernel(%arg0: i32, %arg1: i32, %arg2: memref<8x256xf32, #tpu.memory_space<vmem>>, %arg3: memref<8x1xf32, #tpu.memory_space<vmem>>, %arg4: memref<8x1xf32, #tpu.memory_space<vmem>>, %arg5: memref<8x256xf32, #tpu.memory_space<vmem>>) attributes {dimension_semantics = [#tpu.dimension_semantics<parallel>, #tpu.dimension_semantics<parallel>], iteration_bounds = array<i64: 1, 1>, scalar_prefetch = 0 : i64, scratch_operands = 0 : i64, tpu.core_type = #tpu.core_type<tc>, window_params = [{transform_indices = @transform_0, window_bounds = array<i64: 8, 256>}, {transform_indices = @transform_1, window_bounds = array<i64: 8, 1>}, {transform_indices = @transform_2, window_bounds = array<i64: 8, 1>}, {transform_indices = @transform_3, window_bounds = array<i64: 8, 256>}]} {
    %c0 = arith.constant 0 : index
    %c0_0 = arith.constant 0 : index
    %0 = vector.load %arg2[%c0, %c0_0] : memref<8x256xf32, #tpu.memory_space<vmem>>, vector<8x256xf32>
    %c0_1 = arith.constant 0 : index
    %c0_2 = arith.constant 0 : index
    %1 = vector.load %arg3[%c0_1, %c0_2] : memref<8x1xf32, #tpu.memory_space<vmem>>, vector<8x1xf32>
    %2 = vector.broadcast %1 : vector<8x1xf32> to vector<8x256xf32>
    %3 = arith.mulf %0, %2 : vector<8x256xf32>
    %c0_3 = arith.constant 0 : index
    %c0_4 = arith.constant 0 : index
    %4 = vector.load %arg4[%c0_3, %c0_4] : memref<8x1xf32, #tpu.memory_space<vmem>>, vector<8x1xf32>
    %5 = vector.broadcast %4 : vector<8x1xf32> to vector<8x256xf32>
    %6 = arith.addf %3, %5 : vector<8x256xf32>
    %cst = arith.constant -1.000000e+00 : f32
    %cst_5 = arith.constant 1.000000e+00 : f32
    %7 = vector.broadcast %cst : f32 to vector<8x256xf32>
    %8 = arith.maximumf %7, %6 : vector<8x256xf32>
    %9 = vector.broadcast %cst_5 : f32 to vector<8x256xf32>
    %10 = arith.minimumf %9, %8 : vector<8x256xf32>
    %c0_6 = arith.constant 0 : index
    %c0_7 = arith.constant 0 : index
    %11 = vector.load %arg5[%c0_6, %c0_7] : memref<8x256xf32, #tpu.memory_space<vmem>>, vector<8x256xf32>
    tpu.vector_store %arg5[%c0_6, %c0_7], %10 {strides = array<i32>} : memref<8x256xf32, #tpu.memory_space<vmem>>, vector<8x256xf32>,
    return
  }
  func.func @transform_0(%arg0: i32, %arg1: i32) -> (i32, i32) {
    %c0_i32 = arith.constant 0 : i32
    return %arg0, %arg1 : i32, i32
  }
  func.func @transform_1(%arg0: i32, %arg1: i32) -> (i32, i32) {
    %c0_i32 = arith.constant 0 : i32
    %c0_i32_0 = arith.constant 0 : i32
    return %arg0, %c0_i32 : i32, i32
  }
  func.func @transform_2(%arg0: i32, %arg1: i32) -> (i32, i32) {
    %c0_i32 = arith.constant 0 : i32
    %c0_i32_0 = arith.constant 0 : i32
    return %arg0, %c0_i32 : i32, i32
  }
  func.func @transform_3(%arg0: i32, %arg1: i32) -> (i32, i32) {
    %c0_i32 = arith.constant 0 : i32
    return %arg0, %arg1 : i32, i32
  }
}

</mosaic_0001>

<llo_original>
// kernel: tpu_custom_call.1
$region0: #{tpu_custom_call.1}
  #allocation0 [shape = 'u32[]', space=smem, size = 0x4, offset = 0x4, fixed_abs, tag = 'smem constant byte address 0x4 - core index']
  #allocation1 [shape = 'u32[144,128]{1,0:T(1,128)}', space=vmem, size = 0x12000, scoped, tag = 'internal scratch']
  %s0 = inlined_call_operand.vmem [shape: f32[6,256], index: 0, kind: input, shape index: {}]
  %s1 = inlined_call_operand.vmem [shape: f32[6,1], index: 1, kind: input, shape index: {}]
  %s2 = inlined_call_operand.vmem [shape: f32[6,1], index: 2, kind: input, shape index: {}]
  %s3 = inlined_call_operand.hbm [shape: f32[6,256], index: 3, kind: output, shape index: {}]
  %s4 = sld [smem:[#allocation0]]
  $region22: #{tpu_custom_call.1} parent=0
    _
  %s6 = ssub.s32 1, %s4
  %s7 = scalar_select 0, %s6, %s4
  $region1: #{tpu_custom_call.1} parent=0
    #allocation2 [shape = 'u8[8192]{0}', space=vmem, size = 0x2000, scoped, tag = 'output window, operand 0, single buffered']
    #allocation3 [shape = 's32[1]{0}', space=sflag, size = 0x4, scoped, tag = 'scoped memory for tpu_custom_call.1']
    %8 = vsyncpa [#allocation3], 0
    // Predicated region
    $region2: #{tpu_custom_call.1} parent=1 // pred_check
      _
    $region3: #{tpu_custom_call.1} parent=1 // pred_check_branch
      %10 = sbr.rel (0) target = $region5
    $region4: #{tpu_custom_call.1} parent=1 // pred_region
      _
    $region5: #{tpu_custom_call.1} parent=1 // pred_fallthru
      _
    // Predicated region
    $region6: #{tpu_custom_call.1} parent=1 // pred_check
      _
    $region7: #{tpu_custom_call.1} parent=1 // pred_check_branch
      %12 = sbr.rel (0) target = $region9
    $region8: #{tpu_custom_call.1} parent=1 // pred_region
      _
    $region9: #{tpu_custom_call.1} parent=1 // pred_fallthru
      _
    // Predicated region
    $region10: #{tpu_custom_call.1} parent=1 // pred_check
      _
    $region11: #{tpu_custom_call.1} parent=1 // pred_check_branch
      %14 = sbr.rel (0) target = $region13
    $region12: #{tpu_custom_call.1} parent=1 // pred_region
      _
    $region13: #{tpu_custom_call.1} parent=1 // pred_fallthru
      _
    %v15 = vld [vmem:[%s0] sm:$0xff]
    %v16 = vld [vmem:[%s0 + $0x8] sm:$0xff]
    %v17 = vld [vmem:[%s1] sm:$0xff]
    %19 = vset.pattern.permute.xlu0 0
    %20 = vperm.xlu0 %19, %v17
    %v21 = vpop.permute.xlu0 %20
    %v23 = vmul.f32 %v15, %v21
    %v24 = vmul.f32 %v16, %v21
    %v25 = vld [vmem:[%s2] sm:$0xff]
    %27 = vset.pattern.permute.xlu0 0
    %28 = vperm.xlu0 %27, %v25
    %v29 = vpop.permute.xlu0 %28
    %v31 = vadd.f32 %v23, %v29
    %v32 = vadd.f32 %v24, %v29
    %v33 = vmax.f32 %v31, -1.0
    %v34 = vmax.f32 %v32, -1.0
    %v35 = vmin.f32 %v33, 1.0
    %v36 = vmin.f32 %v34, 1.0
    %37 = vst [vmem:[#allocation2] sm:$0xff] %v35
    %38 = vst [vmem:[#allocation2 + $0x8] sm:$0xff] %v36
    // Predicated region
    $region14: #{tpu_custom_call.1} parent=1 // pred_check
      _
    $region15: #{tpu_custom_call.1} parent=1 // pred_check_branch
      %40 = sbr.rel (0) target = $region17
    $region16: #{tpu_custom_call.1} parent=1 // pred_region
      %s42 = ssub.s32 256, 256
      %43 = vsyncadd [#allocation3], %s42
      %s45 = sshll.u32 [#allocation2], 4
      %s46 = int_to_ptr.vmem [resolvable:$true] %s45
      %48 = dma.vmem_to_hbm [thread:$0]  %s46, 256, %s3, [#allocation3]
    $region17: #{tpu_custom_call.1} parent=1 // pred_fallthru
      _
    // Predicated region
    $region18: #{tpu_custom_call.1} parent=1 // pred_check
      _
    $region19: #{tpu_custom_call.1} parent=1 // pred_check_branch
      %50 = sbr.rel (0) target = $region21
    $region20: #{tpu_custom_call.1} parent=1 // pred_region
      %51 = dma.done [#allocation3], 256
    $region21: #{tpu_custom_call.1} parent=1 // pred_fallthru
      _
    %52 = vsyncpa [#allocation3], 1

</llo_original>
